<compile_context>
chip_gen: v7x
topology: tpu7x:2x2x1
jax: 0.10.0
libtpu: 0.0.40
codegen_flags: <defaults>
</compile_context>

<pallas_src>
import math
import functools

import jax
import jax.numpy as jnp
from jax.experimental import pallas as pl
from jax.experimental.pallas import tpu as pltpu


def _deepset_attention_kernel(x_ref, mask_ref, wkq_ref, bkq_ref, w12_ref, b2_ref,
                              o_ref, *, small, inv_dk):
    x = x_ref[...]                                   # (R, Fin) f32, R = G*N rows
    xb = x.astype(jnp.bfloat16)                      # bf16 operand for the MXU

    # ---- fused K/Q projection (one MXU pass).  [Wk | Wq] ordering keeps the
    #      k slice at lane offset 0; only the tanh'd q slice is shifted. ----
    kq = jnp.dot(xb, wkq_ref[...],
                 preferred_element_type=jnp.float32) + bkq_ref[...]   # (R, 2S) f32
    k = kq[:, :small] * inv_dk                       # fold 1/d_k into 3-lane k
    q = jnp.tanh(kq[:, small:])                      # (R, S)

    # ---- attention scores: s[v, u] = <k[v], q[u]> / d_k (no transpose) ----
    s = jax.lax.dot_general(k, q, (((1,), (1,)), ((), ())),
                            preferred_element_type=jnp.float32)       # (R, R)
    # block-diagonal additive mask (0 within an event, -1e30 across events),
    # applied BEFORE the row max/exp so cross-event attention is exactly zero.
    s = s + mask_ref[...]
    s = s - jnp.max(s, axis=1, keepdims=True)
    p = jnp.exp(s)
    row_sum = jnp.sum(p, axis=1, keepdims=True)      # (R, 1) f32

    # deferred softmax normalization: scale the (R, Fin) result, not the (R, R)
    # weights; approx reciprocal goes to the EUP slot.
    att = jnp.dot(p.astype(jnp.bfloat16), xb,
                  preferred_element_type=jnp.float32)                 # (R, Fin)
    att = att * pl.reciprocal(row_sum, approx=True)

    # ---- fused DeepSet output matmul: [x | att] @ [W1; W2] + b2 ----
    xa = jnp.concatenate([x, att], axis=1).astype(jnp.bfloat16)       # (R, 2Fin)
    y = (jnp.dot(xa, w12_ref[...], preferred_element_type=jnp.float32)
         + b2_ref[...])                                               # (R, Fpad)

    # ---- per-row L2 ('fro' over dim=1) normalization + ReLU ----
    # Zero-padded output columns contribute nothing to the sum of squares.
    inv_norm = jax.lax.rsqrt(jnp.sum(y * y, axis=1, keepdims=True) + 1e-12)
    o_ref[...] = jnp.maximum(y * inv_norm, 0.0)


def _choose_events_per_step(num_events, nodes_per_event, rows_target):
    """Largest divisor G of num_events with G*N <= rows_target (>= 1)."""
    g = max(1, min(num_events, rows_target // max(nodes_per_event, 1)))
    while num_events % g != 0:
        g -= 1
    # If everything collapsed into a single grid step, split into two steps (if
    # even) so both v7x TensorCores get work; single-TC chips pay only ~0.35us.
    if g == num_events and num_events >= 2 and num_events % 2 == 0:
        g = num_events // 2
    return g


def deepset_layer_forward(node_data, params, apply_activation=True,
                          rows_target=128):
    """node_data: (E, N, inputsize) f32 -- E events (graphs) of N particles.

    rows_target: rows (G*N) per grid step.  128 saturates v5e's 128x128 MXUs;
    use 256 on v6e/v7x to better amortize the 256-deep systolic array.
    """
    assert apply_activation, "kernel hard-codes ReLU (module default)"
    E, N, fin = node_data.shape
    small = params["wq"].shape[1]
    fout = params["w1"].shape[1]
    fpad = max(128, ((fout + 127) // 128) * 128)     # lane-dense output width
    inv_dk = 1.0 / math.sqrt(small)                  # d_k = sqrt(small_in_features)

    # ---- batch G events per grid step: (E, N, fin) -> (E//G, G*N, fin) ------
    G = _choose_events_per_step(E, N, rows_target)
    steps = E // G
    rows = G * N
    x_grouped = node_data.reshape(steps, rows, fin)  # free, contiguous reshape

    # block-diagonal additive mask, shared by every grid step (VMEM-resident)
    ev = jnp.arange(rows, dtype=jnp.int32) // N
    mask = jnp.where(ev[:, None] == ev[None, :], 0.0, -1e30).astype(jnp.float32)

    # ---- host-side parameter prep (cheap XLA ops, once per call) ------------
    wkq = jnp.concatenate([params["wk"], params["wq"]], axis=1).astype(jnp.bfloat16)
    bkq = jnp.concatenate([params["bk"], params["bq"]], axis=1)      # (1, 2S) f32
    pad = ((0, 0), (0, fpad - fout))
    w12 = jnp.concatenate([jnp.pad(params["w1"], pad),
                           jnp.pad(params["w2"], pad)],
                          axis=0).astype(jnp.bfloat16)               # (2*fin, fpad)
    b2p = jnp.pad(params["b2"], pad)                                 # (1, fpad) f32

    kernel = functools.partial(_deepset_attention_kernel, small=small, inv_dk=inv_dk)

    const = lambda shape: pl.BlockSpec(shape, lambda s: (0, 0))      # VMEM-resident
    # TODO(synk): pipeline_mode=pl.Buffered(1) on the const specs would drop the
    #             redundant second buffer per weight; negligible at these sizes.

    # advisory cost estimate so XLA schedules neighbors around this small kernel
    flops = steps * (rows * (2 * small) * fin * 2        # K|Q projection
                     + rows * rows * small * 2           # scores
                     + rows * rows * fin * 2             # P @ X
                     + rows * (2 * fin) * fpad * 2)      # [x|att] @ [W1;W2]
    transcendentals = steps * (rows * small + rows * rows + 2 * rows)
    bytes_accessed = (x_grouped.size * 4 + steps * rows * fpad * 4
                      + mask.size * 4 + wkq.size * 2 + w12.size * 2
                      + bkq.size * 4 + b2p.size * 4)
    cost = pl.CostEstimate(flops=int(flops),
                           transcendentals=int(transcendentals),
                           bytes_accessed=int(bytes_accessed))

    out = pl.pallas_call(
        kernel,
        out_shape=jax.ShapeDtypeStruct((steps, rows, fpad), jnp.float32),
        grid=(steps,),
        in_specs=[
            pl.BlockSpec((None, rows, fin), lambda s: (s, 0, 0)),  # x (per step)
            const((rows, rows)),                                   # block-diag mask
            const((fin, 2 * small)),                               # [Wk | Wq]  bf16
            const((1, 2 * small)),                                 # [bk | bq]  f32
            const((2 * fin, fpad)),                                # [W1; W2]   bf16
            const((1, fpad)),                                      # b2 (padded) f32
        ],
        out_specs=pl.BlockSpec((None, rows, fpad), lambda s: (s, 0, 0)),
        compiler_params=pltpu.CompilerParams(
            dimension_semantics=("parallel",)),                    # megacore on v7x
        cost_estimate=cost,
    )(x_grouped, mask, wkq, bkq, w12, b2p)

    # TODO(synk): if the consumer is another DeepSetLayer, return the padded
    #             (.., fpad) slab (or bf16) instead of slicing, to skip an
    #             extra HBM round-trip over the padded f32 output.
    return out.reshape(E, N, fpad)[..., :fout]


def _reference(node_data, params):
    """Pure-JAX reference mirroring the kernel's bf16 matmul operands
    (f32 accumulation / f32 elementwise), exact softmax division & norm."""
    small = params["wq"].shape[1]
    inv_dk = 1.0 / math.sqrt(small)
    wq = params["wq"].astype(jnp.bfloat16)
    wk = params["wk"].astype(jnp.bfloat16)
    w1 = params["w1"].astype(jnp.bfloat16)
    w2 = params["w2"].astype(jnp.bfloat16)

    def one_event(x):
        xb = x.astype(jnp.bfloat16)
        q = jnp.tanh(jnp.dot(xb, wq, preferred_element_type=jnp.float32) + params["bq"])
        k = jnp.dot(xb, wk, preferred_element_type=jnp.float32) + params["bk"]
        s = jnp.dot(k, q.T) * inv_dk
        p = jnp.exp(s - jnp.max(s, axis=1, keepdims=True))
        att = jnp.dot(p.astype(jnp.bfloat16), xb, preferred_element_type=jnp.float32)
        att = att / jnp.sum(p, axis=1, keepdims=True)
        y = (jnp.dot(xb, w1, preferred_element_type=jnp.float32)
             + jnp.dot(att.astype(jnp.bfloat16), w2, preferred_element_type=jnp.float32)
             + params["b2"])
        y = y / jnp.linalg.norm(y, axis=1, keepdims=True)
        return jnp.maximum(y, 0.0)

    return jax.vmap(one_event)(node_data)


def init_params(key, inputsize, outputsize):
    small = max(inputsize // 10, 1)
    ks = jax.random.split(key, 6)
    scale = 1.0 / math.sqrt(inputsize)
    return {
        # stored already transposed: (in, out)
        "wq": jax.random.uniform(ks[0], (inputsize, small), jnp.float32, -scale, scale),
        "bq": jax.random.uniform(ks[1], (1, small), jnp.float32, -scale, scale),
        "wk": jax.random.uniform(ks[2], (inputsize, small), jnp.float32, -scale, scale),
        "bk": jax.random.uniform(ks[3], (1, small), jnp.float32, -scale, scale),
        "w1": jax.random.uniform(ks[4], (inputsize, outputsize), jnp.float32, -scale, scale),
        "w2": jax.random.uniform(ks[5], (inputsize, outputsize), jnp.float32, -scale, scale),
        "b2": jnp.zeros((1, outputsize), jnp.float32),
    }


if __name__ == "__main__":
    E = 32          # events (graphs) batched per pallas_call
    N = 8           # particle nodes per event
    inputsize = 32
    outputsize = 16

    key = jax.random.PRNGKey(0)
    k_x, k_p = jax.random.split(key)
    # node_data = concat of g.nodes['particles'].data[name] over input names
    # (the concat "glue" is done here), batched over events.
    node_data = jax.random.normal(k_x, (E, N, inputsize), jnp.float32)
    params = init_params(k_p, inputsize, outputsize)

    out = jax.block_until_ready(deepset_layer_forward(node_data, params))
    assert out.shape == (E, N, outputsize), out.shape

    ref = jax.block_until_ready(_reference(node_data, params))
    assert jnp.allclose(out, ref, atol=2e-2, rtol=2e-2), (
        "mismatch vs reference: max abs err = %e" % float(jnp.max(jnp.abs(out - ref))))

    print("KERNEL_OK")
</pallas_src>

<mosaic_0001>
module attributes {stable_mosaic.version = 11 : i64} {
  func.func @_deepset_attention_kernel(%arg0: i32, %arg1: memref<1x128x32xf32, #tpu.memory_space<vmem>>, %arg2: memref<128x128xf32, #tpu.memory_space<vmem>>, %arg3: memref<32x6xbf16, #tpu.memory_space<vmem>>, %arg4: memref<1x6xf32, #tpu.memory_space<vmem>>, %arg5: memref<64x128xbf16, #tpu.memory_space<vmem>>, %arg6: memref<1x128xf32, #tpu.memory_space<vmem>>, %arg7: memref<1x128x128xf32, #tpu.memory_space<vmem>>) attributes {dimension_semantics = [#tpu.dimension_semantics<parallel>], iteration_bounds = array<i64: 2>, scalar_prefetch = 0 : i64, scratch_operands = 0 : i64, tpu.core_type = #tpu.core_type<tc>, window_params = [{transform_indices = @transform_0, window_bounds = array<i64: 1, 128, 32>}, {pipeline_mode = #tpu.pipeline_mode<synchronous>, transform_indices = @transform_1, window_bounds = array<i64: 128, 128>}, {pipeline_mode = #tpu.pipeline_mode<synchronous>, transform_indices = @transform_2, window_bounds = array<i64: 32, 6>}, {pipeline_mode = #tpu.pipeline_mode<synchronous>, transform_indices = @transform_3, window_bounds = array<i64: 1, 6>}, {pipeline_mode = #tpu.pipeline_mode<synchronous>, transform_indices = @transform_4, window_bounds = array<i64: 64, 128>}, {pipeline_mode = #tpu.pipeline_mode<synchronous>, transform_indices = @transform_5, window_bounds = array<i64: 1, 128>}, {transform_indices = @transform_6, window_bounds = array<i64: 1, 128, 128>}]} {
    %c0 = arith.constant 0 : index
    %c0_0 = arith.constant 0 : index
    %c0_1 = arith.constant 0 : index
    %0 = vector.load %arg1[%c0, %c0_0, %c0_1] : memref<1x128x32xf32, #tpu.memory_space<vmem>>, vector<1x128x32xf32>
    %1 = vector.shape_cast %0 : vector<1x128x32xf32> to vector<128x32xf32>
    %2 = arith.truncf %1 : vector<128x32xf32> to vector<128x32xbf16>
    %c0_2 = arith.constant 0 : index
    %c0_3 = arith.constant 0 : index
    %3 = vector.load %arg3[%c0_2, %c0_3] : memref<32x6xbf16, #tpu.memory_space<vmem>>, vector<32x6xbf16>
    %cst = arith.constant dense<0.000000e+00> : vector<128x6xf32>
    %4 = tpu.matmul %2, %3, %cst {dimension_numbers = #tpu.dot_dimension_numbers<[1], [0], [0], [1], [0, 0, 1, 1], [], []>} : vector<128x32xbf16>, vector<32x6xbf16>, vector<128x6xf32> -> vector<128x6xf32>
    %c0_4 = arith.constant 0 : index
    %c0_5 = arith.constant 0 : index
    %5 = vector.load %arg4[%c0_4, %c0_5] : memref<1x6xf32, #tpu.memory_space<vmem>>, vector<1x6xf32>
    %6 = vector.broadcast %5 : vector<1x6xf32> to vector<128x6xf32>
    %7 = arith.addf %4, %6 : vector<128x6xf32>
    %8 = vector.extract_strided_slice %7 {offsets = [0, 0], sizes = [128, 3], strides = [1, 1]} : vector<128x6xf32> to vector<128x3xf32>
    %cst_6 = arith.constant 0.577350259 : f32
    %9 = vector.broadcast %cst_6 : f32 to vector<128x3xf32>
    %10 = arith.mulf %8, %9 : vector<128x3xf32>
    %11 = vector.extract_strided_slice %7 {offsets = [0, 3], sizes = [128, 3], strides = [1, 1]} : vector<128x6xf32> to vector<128x3xf32>
    %12 = math.tanh %11 : vector<128x3xf32>
    %cst_7 = arith.constant dense<0.000000e+00> : vector<128x128xf32>
    %13 = tpu.matmul %10, %12, %cst_7 {dimension_numbers = #tpu.dot_dimension_numbers<[1], [1], [0], [0], [0, 0, 1, 0], [], []>} : vector<128x3xf32>, vector<128x3xf32>, vector<128x128xf32> -> vector<128x128xf32>
    %c0_8 = arith.constant 0 : index
    %c0_9 = arith.constant 0 : index
    %14 = vector.load %arg2[%c0_8, %c0_9] : memref<128x128xf32, #tpu.memory_space<vmem>>, vector<128x128xf32>
    %15 = arith.addf %13, %14 : vector<128x128xf32>
    %cst_10 = arith.constant dense<0xFF800000> : vector<128xf32>
    %16 = vector.multi_reduction <maximumf>, %15, %cst_10 [1] : vector<128x128xf32> to vector<128xf32>
    %17 = vector.shape_cast %16 : vector<128xf32> to vector<128x1xf32>
    %18 = vector.broadcast %17 : vector<128x1xf32> to vector<128x128xf32>
    %19 = arith.subf %15, %18 : vector<128x128xf32>
    %20 = math.exp %19 : vector<128x128xf32>
    %cst_11 = arith.constant dense<0.000000e+00> : vector<128xf32>
    %21 = vector.multi_reduction <add>, %20, %cst_11 [1] : vector<128x128xf32> to vector<128xf32>
    %22 = vector.shape_cast %21 : vector<128xf32> to vector<128x1xf32>
    %23 = arith.truncf %20 : vector<128x128xf32> to vector<128x128xbf16>
    %cst_12 = arith.constant dense<0.000000e+00> : vector<128x32xf32>
    %24 = tpu.matmul %23, %2, %cst_12 {dimension_numbers = #tpu.dot_dimension_numbers<[1], [0], [0], [1], [0, 0, 1, 1], [], []>} : vector<128x128xbf16>, vector<128x32xbf16>, vector<128x32xf32> -> vector<128x32xf32>
    %25 = tpu.reciprocal %22 {approx = true} : vector<128x1xf32> -> vector<128x1xf32>
    %26 = vector.broadcast %25 : vector<128x1xf32> to vector<128x32xf32>
    %27 = arith.mulf %24, %26 : vector<128x32xf32>
    %28 = tpu.concatenate %1, %27 in 1 : vector<128x32xf32>, vector<128x32xf32> -> vector<128x64xf32>
    %29 = arith.truncf %28 : vector<128x64xf32> to vector<128x64xbf16>
    %c0_13 = arith.constant 0 : index
    %c0_14 = arith.constant 0 : index
    %30 = vector.load %arg5[%c0_13, %c0_14] : memref<64x128xbf16, #tpu.memory_space<vmem>>, vector<64x128xbf16>
    %cst_15 = arith.constant dense<0.000000e+00> : vector<128x128xf32>
    %31 = tpu.matmul %29, %30, %cst_15 {dimension_numbers = #tpu.dot_dimension_numbers<[1], [0], [0], [1], [0, 0, 1, 1], [], []>} : vector<128x64xbf16>, vector<64x128xbf16>, vector<128x128xf32> -> vector<128x128xf32>
    %c0_16 = arith.constant 0 : index
    %c0_17 = arith.constant 0 : index
    %32 = vector.load %arg6[%c0_16, %c0_17] : memref<1x128xf32, #tpu.memory_space<vmem>>, vector<1x128xf32>
    %33 = vector.broadcast %32 : vector<1x128xf32> to vector<128x128xf32>
    %34 = arith.addf %31, %33 : vector<128x128xf32>
    %35 = arith.mulf %34, %34 : vector<128x128xf32>
    %cst_18 = arith.constant dense<0.000000e+00> : vector<128xf32>
    %36 = vector.multi_reduction <add>, %35, %cst_18 [1] : vector<128x128xf32> to vector<128xf32>
    %37 = vector.shape_cast %36 : vector<128xf32> to vector<128x1xf32>
    %cst_19 = arith.constant 9.99999996E-13 : f32
    %38 = vector.broadcast %cst_19 : f32 to vector<128x1xf32>
    %39 = arith.addf %37, %38 : vector<128x1xf32>
    %40 = math.rsqrt %39 : vector<128x1xf32>
    %41 = vector.broadcast %40 : vector<128x1xf32> to vector<128x128xf32>
    %42 = arith.mulf %34, %41 : vector<128x128xf32>
    %cst_20 = arith.constant 0.000000e+00 : f32
    %43 = vector.broadcast %cst_20 : f32 to vector<128x128xf32>
    %44 = arith.maximumf %42, %43 : vector<128x128xf32>
    %c0_21 = arith.constant 0 : index
    %c0_22 = arith.constant 0 : index
    %c0_23 = arith.constant 0 : index
    %45 = vector.load %arg7[%c0_21, %c0_22, %c0_23] : memref<1x128x128xf32, #tpu.memory_space<vmem>>, vector<1x128x128xf32>
    %46 = vector.shape_cast %45 : vector<1x128x128xf32> to vector<128x128xf32>
    %47 = vector.shape_cast %44 : vector<128x128xf32> to vector<1x128x128xf32>
    tpu.vector_store %arg7[%c0_21, %c0_22, %c0_23], %47 {strides = array<i32>} : memref<1x128x128xf32, #tpu.memory_space<vmem>>, vector<1x128x128xf32>,
    return
  }
  func.func @transform_0(%arg0: i32) -> (i32, i32, i32) {
    %c0_i32 = arith.constant 0 : i32
    %c0_i32_0 = arith.constant 0 : i32
    %c0_i32_1 = arith.constant 0 : i32
    return %arg0, %c0_i32, %c0_i32_0 : i32, i32, i32
  }
  func.func @transform_1(%arg0: i32) -> (i32, i32) {
    %c0_i32 = arith.constant 0 : i32
    %c0_i32_0 = arith.constant 0 : i32
    %c0_i32_1 = arith.constant 0 : i32
    return %c0_i32, %c0_i32_0 : i32, i32
  }
  func.func @transform_2(%arg0: i32) -> (i32, i32) {
    %c0_i32 = arith.constant 0 : i32
    %c0_i32_0 = arith.constant 0 : i32
    %c0_i32_1 = arith.constant 0 : i32
    return %c0_i32, %c0_i32_0 : i32, i32
  }
  func.func @transform_3(%arg0: i32) -> (i32, i32) {
    %c0_i32 = arith.constant 0 : i32
    %c0_i32_0 = arith.constant 0 : i32
    %c0_i32_1 = arith.constant 0 : i32
    return %c0_i32, %c0_i32_0 : i32, i32
  }
  func.func @transform_4(%arg0: i32) -> (i32, i32) {
    %c0_i32 = arith.constant 0 : i32
    %c0_i32_0 = arith.constant 0 : i32
    %c0_i32_1 = arith.constant 0 : i32
    return %c0_i32, %c0_i32_0 : i32, i32
  }
  func.func @transform_5(%arg0: i32) -> (i32, i32) {
    %c0_i32 = arith.constant 0 : i32
    %c0_i32_0 = arith.constant 0 : i32
    %c0_i32_1 = arith.constant 0 : i32
    return %c0_i32, %c0_i32_0 : i32, i32
  }
  func.func @transform_6(%arg0: i32) -> (i32, i32, i32) {
    %c0_i32 = arith.constant 0 : i32
    %c0_i32_0 = arith.constant 0 : i32
    %c0_i32_1 = arith.constant 0 : i32
    return %arg0, %c0_i32, %c0_i32_0 : i32, i32, i32
  }
}

</mosaic_0001>

<llo_original>
// kernel: tpu_custom_call.1
$region0: #{tpu_custom_call.1}
  #allocation0 [shape = 'u32[]', space=smem, size = 0x4, offset = 0x4, fixed_abs, tag = 'smem constant byte address 0x4 - core index']
  #allocation1 [shape = 'u32[144,128]{1,0:T(1,128)}', space=vmem, size = 0x12000, scoped, tag = 'internal scratch']
  %s0 = inlined_call_operand.vmem [shape: f32[2,128,32], index: 0, kind: input, shape index: {}]
  %s1 = inlined_call_operand.vmem [shape: f32[128,128], index: 1, kind: input, shape index: {}]
  %s2 = inlined_call_operand.vmem [shape: bf16[32,6], index: 2, kind: input, shape index: {}]
  %s3 = inlined_call_operand.vmem [shape: f32[1,6], index: 3, kind: input, shape index: {}]
  %s4 = inlined_call_operand.vmem [shape: bf16[64,128], index: 4, kind: input, shape index: {}]
  %s5 = inlined_call_operand.vmem [shape: f32[1,128], index: 5, kind: input, shape index: {}]
  %s6 = inlined_call_operand.hbm [shape: f32[2,128,128], index: 6, kind: output, shape index: {}]
  %s7 = sld [smem:[#allocation0]]
  $region57: #{tpu_custom_call.1} parent=0
    _
  %s9 = ssub.s32 1, %s7
  %s10 = scalar_select 0, %s9, %s7
  $region1: #{tpu_custom_call.1} parent=0
    #allocation2 [shape = 'u8[131072]{0}', space=vmem, size = 0x20000, scoped, tag = 'output window, operand 0']
    #allocation3 [shape = 's32[2]{0}', space=sflag, size = 0x8, scoped, tag = 'scoped memory for tpu_custom_call.1']
    %11 = vsyncpa [#allocation3], 0
    %s12 = scalar_lea.sflag [#allocation3], 1
    %13 = vsyncpa %s12, 0
    loop: start=0, step=1, limit=4
    $region2: #{tpu_custom_call.1} parent=1 // loop_pre_header
      _
    $region3: #{tpu_custom_call.1} parent=1 // loop_header
      %s15 = sphi 0, %s19
      %p16 = scmp.ge.s32.totalorder %s15, 4
      %s25 = sphi 0, %s27
      %s28 = sphi 0, %s25
      %s29 = sphi 0, %s28
      %s45 = sphi 0, %s29
      %s49 = sphi 0, %s49
      %s51 = sphi 0, %s49
      %s52 = sphi 0, %s51
      %s66 = sphi 0, %s52
      %s70 = sphi 0, %s70
      %s72 = sphi 0, %s70
      %s73 = sphi 0, %s72
      %s87 = sphi 0, %s73
      %s91 = sphi 0, %s91
      %s93 = sphi 0, %s91
      %s94 = sphi 0, %s93
      %s108 = sphi 0, %s94
      %s112 = sphi 0, %s112
      %s114 = sphi 0, %s112
      %s115 = sphi 0, %s114
      %s129 = sphi 0, %s115
      %s133 = sphi 0, %s133
      %s135 = sphi 0, %s133
      %s136 = sphi 0, %s135
      %s150 = sphi 0, %s136
      %s156 = sphi 0, %s158
      %s159 = sphi 0, %s156
      %s160 = sphi 0, %s159
      %s176 = sphi 0, %s160
    $region4: #{tpu_custom_call.1} parent=1 // loop_header_branch
      %18 = sbr.rel (%p16) target = $region8
    $region5: #{tpu_custom_call.1} parent=1 // loop_body
      %s20 = ssub.s32 %s15, 1
      %s21 = ssub.s32 %s15, 2
      %s22 = sadd.s32 %s15, 1
      %s23 = ssub.s32 %s15, %s22
      %p24 = scmp.eq.s32.totalorder %s23, 0
      %s26 = sadd.s32 %s25, 1
      %s27 = scalar_select %p24, %s25, %s26
      %p30 = pneg %p24
      %p31 = scmp.eq.s32.totalorder %s15, 1
      %p32 = por %p30, %p31
      %p33 = scmp.ne.s32.totalorder %s25, %s28
      %p34 = scmp.eq.s32.totalorder %s15, 0
      %p35 = por %p33, %p34
      %p36 = scmp.ne.s32.totalorder %s25, %s28
      %p37 = scmp.eq.s32.totalorder %s20, 1
      %p38 = por %p36, %p37
      %p39 = scmp.ne.s32.totalorder %s28, %s29
      %p40 = scmp.eq.s32.totalorder %s20, 0
      %p41 = por %p39, %p40
      %p42 = scmp.ne.s32.totalorder %s28, %s29
      %p43 = scmp.eq.s32.totalorder %s21, 1
      %p44 = por %p42, %p43
      %p46 = scmp.ne.s32.totalorder %s29, %s45
      %p47 = scmp.eq.s32.totalorder %s21, 0
      %p48 = por %p46, %p47
      %s50 = sadd.s32 %s49, 1
      %p53 = scmp.eq.s32.totalorder %s15, 1
      %p54 = scmp.ne.s32.totalorder %s49, %s51
      %p55 = scmp.eq.s32.totalorder %s15, 0
      %p56 = por %p54, %p55
      %p57 = scmp.ne.s32.totalorder %s49, %s51
      %p58 = scmp.eq.s32.totalorder %s20, 1
      %p59 = por %p57, %p58
      %p60 = scmp.ne.s32.totalorder %s51, %s52
      %p61 = scmp.eq.s32.totalorder %s20, 0
      %p62 = por %p60, %p61
      %p63 = scmp.ne.s32.totalorder %s51, %s52
      %p64 = scmp.eq.s32.totalorder %s21, 1
      %p65 = por %p63, %p64
      %p67 = scmp.ne.s32.totalorder %s52, %s66
      %p68 = scmp.eq.s32.totalorder %s21, 0
      %p69 = por %p67, %p68
      %s71 = sadd.s32 %s70, 1
      %p74 = scmp.eq.s32.totalorder %s15, 1
      %p75 = scmp.ne.s32.totalorder %s70, %s72
      %p76 = scmp.eq.s32.totalorder %s15, 0
      %p77 = por %p75, %p76
      %p78 = scmp.ne.s32.totalorder %s70, %s72
      %p79 = scmp.eq.s32.totalorder %s20, 1
      %p80 = por %p78, %p79
      %p81 = scmp.ne.s32.totalorder %s72, %s73
      %p82 = scmp.eq.s32.totalorder %s20, 0
      %p83 = por %p81, %p82
      %p84 = scmp.ne.s32.totalorder %s72, %s73
      %p85 = scmp.eq.s32.totalorder %s21, 1
      %p86 = por %p84, %p85
      %p88 = scmp.ne.s32.totalorder %s73, %s87
      %p89 = scmp.eq.s32.totalorder %s21, 0
      %p90 = por %p88, %p89
      %s92 = sadd.s32 %s91, 1
      %p95 = scmp.eq.s32.totalorder %s15, 1
      %p96 = scmp.ne.s32.totalorder %s91, %s93
      %p97 = scmp.eq.s32.totalorder %s15, 0
      %p98 = por %p96, %p97
      %p99 = scmp.ne.s32.totalorder %s91, %s93
      %p100 = scmp.eq.s32.totalorder %s20, 1
      %p101 = por %p99, %p100
      %p102 = scmp.ne.s32.totalorder %s93, %s94
      %p103 = scmp.eq.s32.totalorder %s20, 0
      %p104 = por %p102, %p103
      %p105 = scmp.ne.s32.totalorder %s93, %s94
      %p106 = scmp.eq.s32.totalorder %s21, 1
      %p107 = por %p105, %p106
      %p109 = scmp.ne.s32.totalorder %s94, %s108
      %p110 = scmp.eq.s32.totalorder %s21, 0
      %p111 = por %p109, %p110
      %s113 = sadd.s32 %s112, 1
      %p116 = scmp.eq.s32.totalorder %s15, 1
      %p117 = scmp.ne.s32.totalorder %s112, %s114
      %p118 = scmp.eq.s32.totalorder %s15, 0
      %p119 = por %p117, %p118
      %p120 = scmp.ne.s32.totalorder %s112, %s114
      %p121 = scmp.eq.s32.totalorder %s20, 1
      %p122 = por %p120, %p121
      %p123 = scmp.ne.s32.totalorder %s114, %s115
      %p124 = scmp.eq.s32.totalorder %s20, 0
      %p125 = por %p123, %p124
      %p126 = scmp.ne.s32.totalorder %s114, %s115
      %p127 = scmp.eq.s32.totalorder %s21, 1
      %p128 = por %p126, %p127
      %p130 = scmp.ne.s32.totalorder %s115, %s129
      %p131 = scmp.eq.s32.totalorder %s21, 0
      %p132 = por %p130, %p131
      %s134 = sadd.s32 %s133, 1
      %p137 = scmp.eq.s32.totalorder %s15, 1
      %p138 = scmp.ne.s32.totalorder %s133, %s135
      %p139 = scmp.eq.s32.totalorder %s15, 0
      %p140 = por %p138, %p139
      %p141 = scmp.ne.s32.totalorder %s133, %s135
      %p142 = scmp.eq.s32.totalorder %s20, 1
      %p143 = por %p141, %p142
      %p144 = scmp.ne.s32.totalorder %s135, %s136
      %p145 = scmp.eq.s32.totalorder %s20, 0
      %p146 = por %p144, %p145
      %p147 = scmp.ne.s32.totalorder %s135, %s136
      %p148 = scmp.eq.s32.totalorder %s21, 1
      %p149 = por %p147, %p148
      %p151 = scmp.ne.s32.totalorder %s136, %s150
      %p152 = scmp.eq.s32.totalorder %s21, 0
      %p153 = por %p151, %p152
      %s154 = ssub.s32 %s15, %s22
      %p155 = scmp.eq.s32.totalorder %s154, 0
      %s157 = sadd.s32 %s156, 1
      %s158 = scalar_select %p155, %s156, %s157
      %p161 = pneg %p155
      %p162 = scmp.eq.s32.totalorder %s15, 1
      %p163 = por %p161, %p162
      %p164 = scmp.ne.s32.totalorder %s156, %s159
      %p165 = scmp.eq.s32.totalorder %s15, 0
      %p166 = por %p164, %p165
      %p167 = scmp.ne.s32.totalorder %s156, %s159
      %p168 = scmp.eq.s32.totalorder %s20, 1
      %p169 = por %p167, %p168
      %p170 = scmp.ne.s32.totalorder %s159, %s160
      %p171 = scmp.eq.s32.totalorder %s20, 0
      %p172 = por %p170, %p171
      %p173 = scmp.ne.s32.totalorder %s159, %s160
      %p174 = scmp.eq.s32.totalorder %s21, 1
      %p175 = por %p173, %p174
      %p177 = scmp.ne.s32.totalorder %s160, %s176
      %p178 = scmp.eq.s32.totalorder %s21, 0
      %p179 = por %p177, %p178
      %p180 = scmp.le.s32.totalorder 1, %s15
      %p181 = scmp.lt.s32.totalorder %s15, 3
      %p182 = pnand %p180, %p181
      %p183 = pneg %p182
      // Predicated region
      $region9: #{tpu_custom_call.1} parent=5 // pred_check
        _
      $region10: #{tpu_custom_call.1} parent=5 // pred_check_branch
        %185 = sbr.rel (%p182) target = $region12
      $region11: #{tpu_custom_call.1} parent=5 // pred_region
        %s186 = ssub.s32 %s15, 1
        // Predicated region
        $region13: #{tpu_custom_call.1} parent=11 // pred_check
          %p187 = pneg %p62
        $region14: #{tpu_custom_call.1} parent=11 // pred_check_branch
          %189 = sbr.rel (%p187) target = $region16
        $region15: #{tpu_custom_call.1} parent=11 // pred_region
          _
        $region16: #{tpu_custom_call.1} parent=11 // pred_fallthru
          _
        // Predicated region
        $region17: #{tpu_custom_call.1} parent=11 // pred_check
          %p190 = pneg %p83
        $region18: #{tpu_custom_call.1} parent=11 // pred_check_branch
          %192 = sbr.rel (%p190) target = $region20
        $region19: #{tpu_custom_call.1} parent=11 // pred_region
          _
        $region20: #{tpu_custom_call.1} parent=11 // pred_fallthru
          _
        // Predicated region
        $region21: #{tpu_custom_call.1} parent=11 // pred_check
          %p193 = pneg %p104
        $region22: #{tpu_custom_call.1} parent=11 // pred_check_branch
          %195 = sbr.rel (%p193) target = $region24
        $region23: #{tpu_custom_call.1} parent=11 // pred_region
          _
        $region24: #{tpu_custom_call.1} parent=11 // pred_fallthru
          _
        // Predicated region
        $region25: #{tpu_custom_call.1} parent=11 // pred_check
          %p196 = pneg %p125
        $region26: #{tpu_custom_call.1} parent=11 // pred_check_branch
          %198 = sbr.rel (%p196) target = $region28
        $region27: #{tpu_custom_call.1} parent=11 // pred_region
          _
        $region28: #{tpu_custom_call.1} parent=11 // pred_fallthru
          _
        // Predicated region
        $region29: #{tpu_custom_call.1} parent=11 // pred_check
          %p199 = pneg %p146
        $region30: #{tpu_custom_call.1} parent=11 // pred_check_branch
          %201 = sbr.rel (%p199) target = $region32
        $region31: #{tpu_custom_call.1} parent=11 // pred_region
          _
        $region32: #{tpu_custom_call.1} parent=11 // pred_fallthru
          _
      $region12: #{tpu_custom_call.1} parent=5 // pred_fallthru
        _
      %p202 = scmp.lt.s32.totalorder %s15, 2
      // Predicated region
      $region33: #{tpu_custom_call.1} parent=5 // pred_check
        %p203 = pneg %p202
      $region34: #{tpu_custom_call.1} parent=5 // pred_check_branch
        %205 = sbr.rel (%p203) target = $region36
      $region35: #{tpu_custom_call.1} parent=5 // pred_region
        // Predicated region
        $region37: #{tpu_custom_call.1} parent=35 // pred_check
          %p206 = pneg %p35
        $region38: #{tpu_custom_call.1} parent=35 // pred_check_branch
          %208 = sbr.rel (%p206) target = $region40
        $region39: #{tpu_custom_call.1} parent=35 // pred_region
          %p209 = scmp.lt.s32.totalorder %s15, 1
          %s210 = scalar_select %p209, %s15, 1
          %s211 = smul.addr %s210, 16
          %s212 = smul.addr %s211, 8
          %s213 = scalar_lea.vmem %s0, %s212
        $region40: #{tpu_custom_call.1} parent=35 // pred_fallthru
          _
      $region36: #{tpu_custom_call.1} parent=5 // pred_fallthru
        _
      %p214 = scmp.le.s32.totalorder 1, %s15
      %p215 = scmp.lt.s32.totalorder %s15, 3
      %p216 = pnand %p214, %p215
      %p217 = pneg %p216
      // Predicated region
      $region41: #{tpu_custom_call.1} parent=5 // pred_check
        _
      $region42: #{tpu_custom_call.1} parent=5 // pred_check_branch
        %219 = sbr.rel (%p216) target = $region44
      $region43: #{tpu_custom_call.1} parent=5 // pred_region
        %s220 = ssub.s32 %s15, 1
        %p221 = scmp.lt.s32.totalorder %s20, 1
        %s222 = scalar_select %p221, %s20, 1
        %s223 = smul.addr %s222, 16
        %s224 = smul.addr %s223, 8
        %s225 = scalar_lea.vmem %s0, %s224
        %p226 = pneg %p41
        %p227 = pneg %p38
        %p228 = pneg %p62
        %p229 = pneg %p59
        %p230 = pneg %p83
        %p231 = pneg %p80
        %p232 = pneg %p104
        %p233 = pneg %p101
        %p234 = pneg %p125
        %p235 = pneg %p122
        %p236 = pneg %p146
        %p237 = pneg %p143
        %p238 = pneg %p172
        %p239 = pneg %p169
        %s240 = sand.u32 %s159, 1
        %s241 = scalar_lea.sflag [#allocation3], %s240
        %s242 = sand.u32 %s159, 1
        %s243 = smul.addr %s242, 128
        %s244 = scalar_lea.vmem [#allocation2], %s243
        %p245 = scmp.lt.s32.totalorder %s20, 1
        %s246 = scalar_select %p245, %s20, 1
        %s247 = smul.addr %s246, 16
        %s248 = smul.addr %s247, 8
        %s249 = scalar_lea.vmem %s0, %s248
        %v251 = vld [vmem:[%s249] sm:$0xff]
        %v252 = vld [vmem:[%s249 + $0x8] sm:$0xff]
        %v253 = vld [vmem:[%s249 + $0x10] sm:$0xff]
        %v254 = vld [vmem:[%s249 + $0x18] sm:$0xff]
        %v255 = vld [vmem:[%s249 + $0x20] sm:$0xff]
        %v256 = vld [vmem:[%s249 + $0x28] sm:$0xff]
        %v257 = vld [vmem:[%s249 + $0x30] sm:$0xff]
        %v258 = vld [vmem:[%s249 + $0x38] sm:$0xff]
        %v259 = vld [vmem:[%s249 + $0x40] sm:$0xff]
        %v260 = vld [vmem:[%s249 + $0x48] sm:$0xff]
        %v261 = vld [vmem:[%s249 + $0x50] sm:$0xff]
        %v262 = vld [vmem:[%s249 + $0x58] sm:$0xff]
        %v263 = vld [vmem:[%s249 + $0x60] sm:$0xff]
        %v264 = vld [vmem:[%s249 + $0x68] sm:$0xff]
        %v265 = vld [vmem:[%s249 + $0x70] sm:$0xff]
        %v266 = vld [vmem:[%s249 + $0x78] sm:$0xff]
        %v267 = vpack.c.bf16 %v252, %v251
        %v268 = vpack.c.bf16 %v254, %v253
        %v269 = vpack.c.bf16 %v256, %v255
        %v270 = vpack.c.bf16 %v258, %v257
        %v271 = vpack.c.bf16 %v260, %v259
        %v272 = vpack.c.bf16 %v262, %v261
        %v273 = vpack.c.bf16 %v264, %v263
        %v274 = vpack.c.bf16 %v266, %v265
        %v275 = vld [vmem:[%s2] sm:$0xf]
        %v276 = vld [vmem:[%s2 + $0x4] sm:$0xf]
        %v277 = vld [vmem:[%s2 + $0x8] sm:$0xf]
        %v278 = vld [vmem:[%s2 + $0xc] sm:$0xf]
        %v279 = vld [vmem:[%s3] sm:$0x1]
        %v281 = vlaneseq
        %v282 = vshrl.u32 %v281, 7
        %v283 = vsub.s32 0, %v282
        %v284 = vrot.slane %v279, %v283
        %v290 = vunpack.c.l.b16 %v275
        %v291 = vunpack.c.l.b16 %v276
        %v292 = vunpack.c.l.b16 %v277
        %v293 = vunpack.c.l.b16 %v278
        %v294 = vpack.c.b16 %v291, %v290
        %v295 = vpack.c.b16 %v293, %v292
        %vm298 = vcmask 261120
        %v300 = vsel %vm298, %v267, 0
        %v303 = vsel %vm298, %v268, 0
        %v306 = vsel %vm298, %v269, 0
        %v309 = vsel %vm298, %v270, 0
        %v312 = vsel %vm298, %v271, 0
        %v315 = vsel %vm298, %v272, 0
        %v318 = vsel %vm298, %v273, 0
        %v321 = vsel %vm298, %v274, 0
        %323 = vmatprep.subr.bf16.mxu0 0
        %324 = vmatpush1.bf16.msra.mxu0 %v294
        %325 = vmatprep.subr.bf16.mxu0 0
        %326 = vmatpush1.bf16.msra.mxu0 %v295
        %327 = vmatprep.subr.bf16.mxu0 0
        %328 = vmatpush1.bf16.msra.mxu0 0
        %329 = vmatprep.subr.bf16.mxu0 0
        %330 = vmatpush1.bf16.msra.mxu0 0
        %331 = vmatprep.subr.bf16.mxu0 0
        %332 = vmatpush1.bf16.msra.mxu0 0
        %333 = vmatprep.subr.bf16.mxu0 0
        %334 = vmatpush1.bf16.msra.mxu0 0
        %335 = vmatprep.subr.bf16.mxu0 0
        %336 = vmatpush1.bf16.msra.mxu0 0
        %337 = vmatprep.subr.bf16.mxu0 0
        %338 = vmatpush1.bf16.msra.mxu0 0
        %339 = vmatprep.subr.bf16.mxu0 0
        %340 = vmatpush1.bf16.msra.mxu0 0
        %341 = vmatprep.subr.bf16.mxu0 0
        %342 = vmatpush1.bf16.msra.mxu0 0
        %343 = vmatprep.subr.bf16.mxu0 0
        %344 = vmatpush1.bf16.msra.mxu0 0
        %345 = vmatprep.subr.bf16.mxu0 0
        %346 = vmatpush1.bf16.msra.mxu0 0
        %347 = vmatprep.subr.bf16.mxu0 0
        %348 = vmatpush1.bf16.msra.mxu0 0
        %349 = vmatprep.subr.bf16.mxu0 0
        %350 = vmatpush1.bf16.msra.mxu0 0
        %351 = vmatprep.subr.bf16.mxu0 0
        %352 = vmatpush1.bf16.msra.mxu0 0
        %353 = vmatprep.subr.bf16.mxu0 0
        %354 = vmatpush1.bf16.msra.mxu0 0
        %355 = vmatprep.mubr.bf16.mxu0 0
        %356 = vmatmul.mubr.bf16.gmra.mrb[0].mxu0 %v300
        %v357 = vpop.f32.mrb[0].mxu0
        %v358 = vadd.f32 %v284, %v357
        %v359 = vpop.f32.mrb[0].mxu0
        %v360 = vpop.f32.mrb[0].mxu0
        %v361 = vadd.f32 %v284, %v360
        %v362 = vpop.f32.mrb[0].mxu0
        %363 = vmatprep.mubr.bf16.mxu0 0
        %364 = vmatmul.mubr.bf16.gmra.mrb[0].mxu0 %v303
        %v365 = vpop.f32.mrb[0].mxu0
        %v366 = vadd.f32 %v284, %v365
        %v367 = vpop.f32.mrb[0].mxu0
        %v368 = vpop.f32.mrb[0].mxu0
        %v369 = vadd.f32 %v284, %v368
        %v370 = vpop.f32.mrb[0].mxu0
        %371 = vmatprep.mubr.bf16.mxu0 0
        %372 = vmatmul.mubr.bf16.gmra.mrb[0].mxu0 %v306
        %v373 = vpop.f32.mrb[0].mxu0
        %v374 = vadd.f32 %v284, %v373
        %v375 = vpop.f32.mrb[0].mxu0
        %v376 = vpop.f32.mrb[0].mxu0
        %v377 = vadd.f32 %v284, %v376
        %v378 = vpop.f32.mrb[0].mxu0
        %379 = vmatprep.mubr.bf16.mxu0 0
        %380 = vmatmul.mubr.bf16.gmra.mrb[0].mxu0 %v309
        %v381 = vpop.f32.mrb[0].mxu0
        %v382 = vadd.f32 %v284, %v381
        %v383 = vpop.f32.mrb[0].mxu0
        %v384 = vpop.f32.mrb[0].mxu0
        %v385 = vadd.f32 %v284, %v384
        %v386 = vpop.f32.mrb[0].mxu0
        %387 = vmatprep.mubr.bf16.mxu0 0
        %388 = vmatmul.mubr.bf16.gmra.mrb[0].mxu0 %v312
        %v389 = vpop.f32.mrb[0].mxu0
        %v390 = vadd.f32 %v284, %v389
        %v391 = vpop.f32.mrb[0].mxu0
        %v392 = vpop.f32.mrb[0].mxu0
        %v393 = vadd.f32 %v284, %v392
        %v394 = vpop.f32.mrb[0].mxu0
        %395 = vmatprep.mubr.bf16.mxu0 0
        %396 = vmatmul.mubr.bf16.gmra.mrb[0].mxu0 %v315
        %v397 = vpop.f32.mrb[0].mxu0
        %v398 = vadd.f32 %v284, %v397
        %v399 = vpop.f32.mrb[0].mxu0
        %v400 = vpop.f32.mrb[0].mxu0
        %v401 = vadd.f32 %v284, %v400
        %v402 = vpop.f32.mrb[0].mxu0
        %403 = vmatprep.mubr.bf16.mxu0 0
        %404 = vmatmul.mubr.bf16.gmra.mrb[0].mxu0 %v318
        %v405 = vpop.f32.mrb[0].mxu0
        %v406 = vadd.f32 %v284, %v405
        %v407 = vpop.f32.mrb[0].mxu0
        %v408 = vpop.f32.mrb[0].mxu0
        %v409 = vadd.f32 %v284, %v408
        %v410 = vpop.f32.mrb[0].mxu0
        %411 = vmatprep.mubr.bf16.mxu0 0
        %412 = vmatmul.mubr.bf16.gmra.mrb[0].mxu0 %v321
        %v413 = vpop.f32.mrb[0].mxu0
        %v414 = vadd.f32 %v284, %v413
        %v415 = vpop.f32.mrb[0].mxu0
        %v416 = vpop.f32.mrb[0].mxu0
        %v417 = vadd.f32 %v284, %v416
        %v418 = vpop.f32.mrb[0].mxu0
        %419 = vdwg.mxu0
        %v420 = vmul.f32 %v358, 0.57735026
        %v421 = vmul.f32 %v361, 0.57735026
        %v422 = vmul.f32 %v366, 0.57735026
        %v423 = vmul.f32 %v369, 0.57735026
        %v424 = vmul.f32 %v374, 0.57735026
        %v425 = vmul.f32 %v377, 0.57735026
        %v426 = vmul.f32 %v382, 0.57735026
        %v427 = vmul.f32 %v385, 0.57735026
        %v428 = vmul.f32 %v390, 0.57735026
        %v429 = vmul.f32 %v393, 0.57735026
        %v430 = vmul.f32 %v398, 0.57735026
        %v431 = vmul.f32 %v401, 0.57735026
        %v432 = vmul.f32 %v406, 0.57735026
        %v433 = vmul.f32 %v409, 0.57735026
        %v434 = vmul.f32 %v414, 0.57735026
        %v435 = vmul.f32 %v417, 0.57735026
        %v436 = vtanh.pop %v358
        %v437 = vtanh.pop %v361
        %v438 = vtanh.pop %v366
        %v439 = vtanh.pop %v369
        %v440 = vtanh.pop %v374
        %v441 = vtanh.pop %v377
        %v442 = vtanh.pop %v382
        %v443 = vtanh.pop %v385
        %v444 = vtanh.pop %v390
        %v445 = vtanh.pop %v393
        %v446 = vtanh.pop %v398
        %v447 = vtanh.pop %v401
        %v448 = vtanh.pop %v406
        %v449 = vtanh.pop %v409
        %v450 = vtanh.pop %v414
        %v451 = vtanh.pop %v417
        %v452 = vld [vmem:[%s1] sm:$0xff]
        %v453 = vld [vmem:[%s1 + $0x8] sm:$0xff]
        %v454 = vld [vmem:[%s1 + $0x10] sm:$0xff]
        %v455 = vld [vmem:[%s1 + $0x18] sm:$0xff]
        %v456 = vld [vmem:[%s1 + $0x20] sm:$0xff]
        %v457 = vld [vmem:[%s1 + $0x28] sm:$0xff]
        %v458 = vld [vmem:[%s1 + $0x30] sm:$0xff]
        %v459 = vld [vmem:[%s1 + $0x38] sm:$0xff]
        %v460 = vld [vmem:[%s1 + $0x40] sm:$0xff]
        %v461 = vld [vmem:[%s1 + $0x48] sm:$0xff]
        %v462 = vld [vmem:[%s1 + $0x50] sm:$0xff]
        %v463 = vld [vmem:[%s1 + $0x58] sm:$0xff]
        %v464 = vld [vmem:[%s1 + $0x60] sm:$0xff]
        %v465 = vld [vmem:[%s1 + $0x68] sm:$0xff]
        %v466 = vld [vmem:[%s1 + $0x70] sm:$0xff]
        %v467 = vld [vmem:[%s1 + $0x78] sm:$0xff]
        %484 = vrot.lane.b32.xlu0 %v436, 125
        %v485 = vpop.permute.xlu0 %484
        %486 = vrot.lane.b32.xlu0 %v437, 125
        %v487 = vpop.permute.xlu0 %486
        %488 = vrot.lane.b32.xlu0 %v438, 125
        %v489 = vpop.permute.xlu0 %488
        %490 = vrot.lane.b32.xlu0 %v439, 125
        %v491 = vpop.permute.xlu0 %490
        %492 = vrot.lane.b32.xlu0 %v440, 125
        %v493 = vpop.permute.xlu0 %492
        %494 = vrot.lane.b32.xlu0 %v441, 125
        %v495 = vpop.permute.xlu0 %494
        %496 = vrot.lane.b32.xlu0 %v442, 125
        %v497 = vpop.permute.xlu0 %496
        %498 = vrot.lane.b32.xlu0 %v443, 125
        %v499 = vpop.permute.xlu0 %498
        %500 = vrot.lane.b32.xlu0 %v444, 125
        %v501 = vpop.permute.xlu0 %500
        %502 = vrot.lane.b32.xlu0 %v445, 125
        %v503 = vpop.permute.xlu0 %502
        %504 = vrot.lane.b32.xlu0 %v446, 125
        %v505 = vpop.permute.xlu0 %504
        %506 = vrot.lane.b32.xlu0 %v447, 125
        %v507 = vpop.permute.xlu0 %506
        %508 = vrot.lane.b32.xlu0 %v448, 125
        %v509 = vpop.permute.xlu0 %508
        %510 = vrot.lane.b32.xlu0 %v449, 125
        %v511 = vpop.permute.xlu0 %510
        %512 = vrot.lane.b32.xlu0 %v450, 125
        %v513 = vpop.permute.xlu0 %512
        %514 = vrot.lane.b32.xlu0 %v451, 125
        %v515 = vpop.permute.xlu0 %514
        %vm516 = vcmask 23552
        %v518 = vsel %vm516, %v420, 0
        %v521 = vsel %vm516, %v421, 0
        %v524 = vsel %vm516, %v422, 0
        %v527 = vsel %vm516, %v423, 0
        %v530 = vsel %vm516, %v424, 0
        %v533 = vsel %vm516, %v425, 0
        %v536 = vsel %vm516, %v426, 0
        %v539 = vsel %vm516, %v427, 0
        %v542 = vsel %vm516, %v428, 0
        %v545 = vsel %vm516, %v429, 0
        %v548 = vsel %vm516, %v430, 0
        %v551 = vsel %vm516, %v431, 0
        %v554 = vsel %vm516, %v432, 0
        %v557 = vsel %vm516, %v433, 0
        %v560 = vsel %vm516, %v434, 0
        %v563 = vsel %vm516, %v435, 0
        %v565 = vsel %vm516, %v485, 0
        %v567 = vsel %vm516, %v487, 0
        %v569 = vsel %vm516, %v489, 0
        %v571 = vsel %vm516, %v491, 0
        %v573 = vsel %vm516, %v493, 0
        %v575 = vsel %vm516, %v495, 0
        %v577 = vsel %vm516, %v497, 0
        %v579 = vsel %vm516, %v499, 0
        %v581 = vsel %vm516, %v501, 0
        %v583 = vsel %vm516, %v503, 0
        %v585 = vsel %vm516, %v505, 0
        %v587 = vsel %vm516, %v507, 0
        %v589 = vsel %vm516, %v509, 0
        %v591 = vsel %vm516, %v511, 0
        %v593 = vsel %vm516, %v513, 0
        %v595 = vsel %vm516, %v515, 0
        %597 = vmatprep.subr.mxu0 0.0
        %598 = vmatpush1.xpose.msra.mxu0 %v565
        %599 = vmatprep.subr.mxu0 0.0
        %600 = vmatpush1.xpose.msra.mxu0 %v567
        %601 = vmatprep.subr.mxu0 0.0
        %602 = vmatpush1.xpose.msra.mxu0 %v569
        %603 = vmatprep.subr.mxu0 0.0
        %604 = vmatpush1.xpose.msra.mxu0 %v571
        %605 = vmatprep.subr.mxu0 0.0
        %606 = vmatpush1.xpose.msra.mxu0 %v573
        %607 = vmatprep.subr.mxu0 0.0
        %608 = vmatpush1.xpose.msra.mxu0 %v575
        %609 = vmatprep.subr.mxu0 0.0
        %610 = vmatpush1.xpose.msra.mxu0 %v577
        %611 = vmatprep.subr.mxu0 0.0
        %612 = vmatpush1.xpose.msra.mxu0 %v579
        %613 = vmatprep.subr.mxu0 0.0
        %614 = vmatpush1.xpose.msra.mxu0 %v581
        %615 = vmatprep.subr.mxu0 0.0
        %616 = vmatpush1.xpose.msra.mxu0 %v583
        %617 = vmatprep.subr.mxu0 0.0
        %618 = vmatpush1.xpose.msra.mxu0 %v585
        %619 = vmatprep.subr.mxu0 0.0
        %620 = vmatpush1.xpose.msra.mxu0 %v587
        %621 = vmatprep.subr.mxu0 0.0
        %622 = vmatpush1.xpose.msra.mxu0 %v589
        %623 = vmatprep.subr.mxu0 0.0
        %624 = vmatpush1.xpose.msra.mxu0 %v591
        %625 = vmatprep.subr.mxu0 0.0
        %626 = vmatpush1.xpose.msra.mxu0 %v593
        %627 = vmatprep.subr.mxu0 0.0
        %628 = vmatpush1.xpose.msra.mxu0 %v595
        %629 = vmatprep.subr.mxu0 0.0
        %630 = vmatpush1.xpose.msra.mxu0 0.0
        %631 = vmatprep.subr.mxu0 0.0
        %632 = vmatpush1.xpose.msra.mxu0 0.0
        %633 = vmatprep.subr.mxu0 0.0
        %634 = vmatpush1.xpose.msra.mxu0 0.0
        %635 = vmatprep.subr.mxu0 0.0
        %636 = vmatpush1.xpose.msra.mxu0 0.0
        %637 = vmatprep.subr.mxu0 0.0
        %638 = vmatpush1.xpose.msra.mxu0 0.0
        %639 = vmatprep.subr.mxu0 0.0
        %640 = vmatpush1.xpose.msra.mxu0 0.0
        %641 = vmatprep.subr.mxu0 0.0
        %642 = vmatpush1.xpose.msra.mxu0 0.0
        %643 = vmatprep.subr.mxu0 0.0
        %644 = vmatpush1.xpose.msra.mxu0 0.0
        %645 = vmatprep.subr.mxu0 0.0
        %646 = vmatpush1.xpose.msra.mxu0 0.0
        %647 = vmatprep.subr.mxu0 0.0
        %648 = vmatpush1.xpose.msra.mxu0 0.0
        %649 = vmatprep.subr.mxu0 0.0
        %650 = vmatpush1.xpose.msra.mxu0 0.0
        %651 = vmatprep.subr.mxu0 0.0
        %652 = vmatpush1.xpose.msra.mxu0 0.0
        %653 = vmatprep.subr.mxu0 0.0
        %654 = vmatpush1.xpose.msra.mxu0 0.0
        %655 = vmatprep.subr.mxu0 0.0
        %656 = vmatpush1.xpose.msra.mxu0 0.0
        %657 = vmatprep.subr.mxu0 0.0
        %658 = vmatpush1.xpose.msra.mxu0 0.0
        %659 = vmatprep.subr.mxu0 0.0
        %660 = vmatpush1.xpose.msra.mxu0 0.0
        %661 = vmatprep.mubr.f32.mxu0 0.0
        %662 = vmatmul.mubr.f32.gmra.mrb[0].mxu0 %v518
        %v663 = vpop.f32.mrb[0].mxu0
        %v664 = vadd.f32 %v452, %v663
        %v665 = vpop.f32.mrb[0].mxu0
        %666 = vmatprep.mubr.f32.mxu0 0.0
        %667 = vmatmul.mubr.f32.gmra.mrb[0].mxu0 %v521
        %v668 = vpop.f32.mrb[0].mxu0
        %v669 = vadd.f32 %v453, %v668
        %v670 = vpop.f32.mrb[0].mxu0
        %671 = vmatprep.mubr.f32.mxu0 0.0
        %672 = vmatmul.mubr.f32.gmra.mrb[0].mxu0 %v524
        %v673 = vpop.f32.mrb[0].mxu0
        %v674 = vadd.f32 %v454, %v673
        %v675 = vpop.f32.mrb[0].mxu0
        %676 = vmatprep.mubr.f32.mxu0 0.0
        %677 = vmatmul.mubr.f32.gmra.mrb[0].mxu0 %v527
        %v678 = vpop.f32.mrb[0].mxu0
        %v679 = vadd.f32 %v455, %v678
        %v680 = vpop.f32.mrb[0].mxu0
        %681 = vmatprep.mubr.f32.mxu0 0.0
        %682 = vmatmul.mubr.f32.gmra.mrb[0].mxu0 %v530
        %v683 = vpop.f32.mrb[0].mxu0
        %v684 = vadd.f32 %v456, %v683
        %v685 = vpop.f32.mrb[0].mxu0
        %686 = vmatprep.mubr.f32.mxu0 0.0
        %687 = vmatmul.mubr.f32.gmra.mrb[0].mxu0 %v533
        %v688 = vpop.f32.mrb[0].mxu0
        %v689 = vadd.f32 %v457, %v688
        %v690 = vpop.f32.mrb[0].mxu0
        %691 = vmatprep.mubr.f32.mxu0 0.0
        %692 = vmatmul.mubr.f32.gmra.mrb[0].mxu0 %v536
        %v693 = vpop.f32.mrb[0].mxu0
        %v694 = vadd.f32 %v458, %v693
        %v695 = vpop.f32.mrb[0].mxu0
        %696 = vmatprep.mubr.f32.mxu0 0.0
        %697 = vmatmul.mubr.f32.gmra.mrb[0].mxu0 %v539
        %v698 = vpop.f32.mrb[0].mxu0
        %v699 = vadd.f32 %v459, %v698
        %v700 = vpop.f32.mrb[0].mxu0
        %701 = vmatprep.mubr.f32.mxu0 0.0
        %702 = vmatmul.mubr.f32.gmra.mrb[0].mxu0 %v542
        %v703 = vpop.f32.mrb[0].mxu0
        %v704 = vadd.f32 %v460, %v703
        %v705 = vpop.f32.mrb[0].mxu0
        %706 = vmatprep.mubr.f32.mxu0 0.0
        %707 = vmatmul.mubr.f32.gmra.mrb[0].mxu0 %v545
        %v708 = vpop.f32.mrb[0].mxu0
        %v709 = vadd.f32 %v461, %v708
        %v710 = vpop.f32.mrb[0].mxu0
        %711 = vmatprep.mubr.f32.mxu0 0.0
        %712 = vmatmul.mubr.f32.gmra.mrb[0].mxu0 %v548
        %v713 = vpop.f32.mrb[0].mxu0
        %v714 = vadd.f32 %v462, %v713
        %v715 = vpop.f32.mrb[0].mxu0
        %716 = vmatprep.mubr.f32.mxu0 0.0
        %717 = vmatmul.mubr.f32.gmra.mrb[0].mxu0 %v551
        %v718 = vpop.f32.mrb[0].mxu0
        %v719 = vadd.f32 %v463, %v718
        %v720 = vpop.f32.mrb[0].mxu0
        %721 = vmatprep.mubr.f32.mxu0 0.0
        %722 = vmatmul.mubr.f32.gmra.mrb[0].mxu0 %v554
        %v723 = vpop.f32.mrb[0].mxu0
        %v724 = vadd.f32 %v464, %v723
        %v725 = vpop.f32.mrb[0].mxu0
        %726 = vmatprep.mubr.f32.mxu0 0.0
        %727 = vmatmul.mubr.f32.gmra.mrb[0].mxu0 %v557
        %v728 = vpop.f32.mrb[0].mxu0
        %v729 = vadd.f32 %v465, %v728
        %v730 = vpop.f32.mrb[0].mxu0
        %731 = vmatprep.mubr.f32.mxu0 0.0
        %732 = vmatmul.mubr.f32.gmra.mrb[0].mxu0 %v560
        %v733 = vpop.f32.mrb[0].mxu0
        %v734 = vadd.f32 %v466, %v733
        %v735 = vpop.f32.mrb[0].mxu0
        %736 = vmatprep.mubr.f32.mxu0 0.0
        %737 = vmatmul.mubr.f32.gmra.mrb[0].mxu0 %v563
        %v738 = vpop.f32.mrb[0].mxu0
        %v739 = vadd.f32 %v467, %v738
        %v740 = vpop.f32.mrb[0].mxu0
        %741 = vdwg.mxu0
        %742 = vmax.xlane.f32.xlu0 %v664
        %v743 = vpop.xlane.xlu0 %742
        %744 = vmax.xlane.f32.xlu0 %v669
        %v745 = vpop.xlane.xlu0 %744
        %746 = vmax.xlane.f32.xlu0 %v674
        %v747 = vpop.xlane.xlu0 %746
        %748 = vmax.xlane.f32.xlu0 %v679
        %v749 = vpop.xlane.xlu0 %748
        %750 = vmax.xlane.f32.xlu0 %v684
        %v751 = vpop.xlane.xlu0 %750
        %752 = vmax.xlane.f32.xlu0 %v689
        %v753 = vpop.xlane.xlu0 %752
        %754 = vmax.xlane.f32.xlu0 %v694
        %v755 = vpop.xlane.xlu0 %754
        %756 = vmax.xlane.f32.xlu0 %v699
        %v757 = vpop.xlane.xlu0 %756
        %758 = vmax.xlane.f32.xlu0 %v704
        %v759 = vpop.xlane.xlu0 %758
        %760 = vmax.xlane.f32.xlu0 %v709
        %v761 = vpop.xlane.xlu0 %760
        %762 = vmax.xlane.f32.xlu0 %v714
        %v763 = vpop.xlane.xlu0 %762
        %764 = vmax.xlane.f32.xlu0 %v719
        %v765 = vpop.xlane.xlu0 %764
        %766 = vmax.xlane.f32.xlu0 %v724
        %v767 = vpop.xlane.xlu0 %766
        %768 = vmax.xlane.f32.xlu0 %v729
        %v769 = vpop.xlane.xlu0 %768
        %770 = vmax.xlane.f32.xlu0 %v734
        %v771 = vpop.xlane.xlu0 %770
        %772 = vmax.xlane.f32.xlu0 %v739
        %v773 = vpop.xlane.xlu0 %772
        %v774 = vsub.f32 %v664, %v743
        %v775 = vsub.f32 %v669, %v745
        %v776 = vsub.f32 %v674, %v747
        %v777 = vsub.f32 %v679, %v749
        %v778 = vsub.f32 %v684, %v751
        %v779 = vsub.f32 %v689, %v753
        %v780 = vsub.f32 %v694, %v755
        %v781 = vsub.f32 %v699, %v757
        %v782 = vsub.f32 %v704, %v759
        %v783 = vsub.f32 %v709, %v761
        %v784 = vsub.f32 %v714, %v763
        %v785 = vsub.f32 %v719, %v765
        %v786 = vsub.f32 %v724, %v767
        %v787 = vsub.f32 %v729, %v769
        %v788 = vsub.f32 %v734, %v771
        %v789 = vsub.f32 %v739, %v773
        %v790 = vmul.f32 %v774, 1.442695
        %v791 = vpow.pop %v790
        %v792 = vmul.f32 %v775, 1.442695
        %v793 = vpow.pop %v792
        %v794 = vmul.f32 %v776, 1.442695
        %v795 = vpow.pop %v794
        %v796 = vmul.f32 %v777, 1.442695
        %v797 = vpow.pop %v796
        %v798 = vmul.f32 %v778, 1.442695
        %v799 = vpow.pop %v798
        %v800 = vmul.f32 %v779, 1.442695
        %v801 = vpow.pop %v800
        %v802 = vmul.f32 %v780, 1.442695
        %v803 = vpow.pop %v802
        %v804 = vmul.f32 %v781, 1.442695
        %v805 = vpow.pop %v804
        %v806 = vmul.f32 %v782, 1.442695
        %v807 = vpow.pop %v806
        %v808 = vmul.f32 %v783, 1.442695
        %v809 = vpow.pop %v808
        %v810 = vmul.f32 %v784, 1.442695
        %v811 = vpow.pop %v810
        %v812 = vmul.f32 %v785, 1.442695
        %v813 = vpow.pop %v812
        %v814 = vmul.f32 %v786, 1.442695
        %v815 = vpow.pop %v814
        %v816 = vmul.f32 %v787, 1.442695
        %v817 = vpow.pop %v816
        %v818 = vmul.f32 %v788, 1.442695
        %v819 = vpow.pop %v818
        %v820 = vmul.f32 %v789, 1.442695
        %v821 = vpow.pop %v820
        %822 = vadd.xlane.f32.xlu0 %v791
        %v823 = vpop.xlane.xlu0 %822
        %824 = vadd.xlane.f32.xlu0 %v793
        %v825 = vpop.xlane.xlu0 %824
        %826 = vadd.xlane.f32.xlu0 %v795
        %v827 = vpop.xlane.xlu0 %826
        %828 = vadd.xlane.f32.xlu0 %v797
        %v829 = vpop.xlane.xlu0 %828
        %830 = vadd.xlane.f32.xlu0 %v799
        %v831 = vpop.xlane.xlu0 %830
        %832 = vadd.xlane.f32.xlu0 %v801
        %v833 = vpop.xlane.xlu0 %832
        %834 = vadd.xlane.f32.xlu0 %v803
        %v835 = vpop.xlane.xlu0 %834
        %836 = vadd.xlane.f32.xlu0 %v805
        %v837 = vpop.xlane.xlu0 %836
        %838 = vadd.xlane.f32.xlu0 %v807
        %v839 = vpop.xlane.xlu0 %838
        %840 = vadd.xlane.f32.xlu0 %v809
        %v841 = vpop.xlane.xlu0 %840
        %842 = vadd.xlane.f32.xlu0 %v811
        %v843 = vpop.xlane.xlu0 %842
        %844 = vadd.xlane.f32.xlu0 %v813
        %v845 = vpop.xlane.xlu0 %844
        %846 = vadd.xlane.f32.xlu0 %v815
        %v847 = vpop.xlane.xlu0 %846
        %848 = vadd.xlane.f32.xlu0 %v817
        %v849 = vpop.xlane.xlu0 %848
        %850 = vadd.xlane.f32.xlu0 %v819
        %v851 = vpop.xlane.xlu0 %850
        %852 = vadd.xlane.f32.xlu0 %v821
        %v853 = vpop.xlane.xlu0 %852
        %v854 = vpack.c.bf16 %v793, %v791
        %v855 = vpack.c.bf16 %v797, %v795
        %v856 = vpack.c.bf16 %v801, %v799
        %v857 = vpack.c.bf16 %v805, %v803
        %v858 = vpack.c.bf16 %v809, %v807
        %v859 = vpack.c.bf16 %v813, %v811
        %v860 = vpack.c.bf16 %v817, %v815
        %v861 = vpack.c.bf16 %v821, %v819
        %862 = vmatprep.subr.bf16.mxu0 0
        %863 = vmatpush1.bf16.msra.mxu0 %v267
        %864 = vmatprep.subr.bf16.mxu0 0
        %865 = vmatpush1.bf16.msra.mxu0 %v268
        %866 = vmatprep.subr.bf16.mxu0 0
        %867 = vmatpush1.bf16.msra.mxu0 %v269
        %868 = vmatprep.subr.bf16.mxu0 0
        %869 = vmatpush1.bf16.msra.mxu0 %v270
        %870 = vmatprep.subr.bf16.mxu0 0
        %871 = vmatpush1.bf16.msra.mxu0 %v271
        %872 = vmatprep.subr.bf16.mxu0 0
        %873 = vmatpush1.bf16.msra.mxu0 %v272
        %874 = vmatprep.subr.bf16.mxu0 0
        %875 = vmatpush1.bf16.msra.mxu0 %v273
        %876 = vmatprep.subr.bf16.mxu0 0
        %877 = vmatpush1.bf16.msra.mxu0 %v274
        %878 = vmatprep.subr.bf16.mxu0 0
        %879 = vmatpush1.bf16.msra.mxu0 0
        %880 = vmatprep.subr.bf16.mxu0 0
        %881 = vmatpush1.bf16.msra.mxu0 0
        %882 = vmatprep.subr.bf16.mxu0 0
        %883 = vmatpush1.bf16.msra.mxu0 0
        %884 = vmatprep.subr.bf16.mxu0 0
        %885 = vmatpush1.bf16.msra.mxu0 0
        %886 = vmatprep.subr.bf16.mxu0 0
        %887 = vmatpush1.bf16.msra.mxu0 0
        %888 = vmatprep.subr.bf16.mxu0 0
        %889 = vmatpush1.bf16.msra.mxu0 0
        %890 = vmatprep.subr.bf16.mxu0 0
        %891 = vmatpush1.bf16.msra.mxu0 0
        %892 = vmatprep.subr.bf16.mxu0 0
        %893 = vmatpush1.bf16.msra.mxu0 0
        %894 = vmatprep.mubr.bf16.mxu0 0
        %895 = vmatmul.mubr.bf16.gmra.mrb[0].mxu0 %v854
        %v896 = vpop.f32.mrb[0].mxu0
        %v897 = vadd.f32 0.0, %v896
        %v898 = vpop.f32.mrb[0].mxu0
        %v899 = vpop.f32.mrb[0].mxu0
        %v900 = vadd.f32 0.0, %v899
        %v901 = vpop.f32.mrb[0].mxu0
        %902 = vmatprep.mubr.bf16.mxu0 0
        %903 = vmatmul.mubr.bf16.gmra.mrb[0].mxu0 %v855
        %v904 = vpop.f32.mrb[0].mxu0
        %v905 = vadd.f32 0.0, %v904
        %v906 = vpop.f32.mrb[0].mxu0
        %v907 = vpop.f32.mrb[0].mxu0
        %v908 = vadd.f32 0.0, %v907
        %v909 = vpop.f32.mrb[0].mxu0
        %910 = vmatprep.mubr.bf16.mxu0 0
        %911 = vmatmul.mubr.bf16.gmra.mrb[0].mxu0 %v856
        %v912 = vpop.f32.mrb[0].mxu0
        %v913 = vadd.f32 0.0, %v912
        %v914 = vpop.f32.mrb[0].mxu0
        %v915 = vpop.f32.mrb[0].mxu0
        %v916 = vadd.f32 0.0, %v915
        %v917 = vpop.f32.mrb[0].mxu0
        %918 = vmatprep.mubr.bf16.mxu0 0
        %919 = vmatmul.mubr.bf16.gmra.mrb[0].mxu0 %v857
        %v920 = vpop.f32.mrb[0].mxu0
        %v921 = vadd.f32 0.0, %v920
        %v922 = vpop.f32.mrb[0].mxu0
        %v923 = vpop.f32.mrb[0].mxu0
        %v924 = vadd.f32 0.0, %v923
        %v925 = vpop.f32.mrb[0].mxu0
        %926 = vmatprep.mubr.bf16.mxu0 0
        %927 = vmatmul.mubr.bf16.gmra.mrb[0].mxu0 %v858
        %v928 = vpop.f32.mrb[0].mxu0
        %v929 = vadd.f32 0.0, %v928
        %v930 = vpop.f32.mrb[0].mxu0
        %v931 = vpop.f32.mrb[0].mxu0
        %v932 = vadd.f32 0.0, %v931
        %v933 = vpop.f32.mrb[0].mxu0
        %934 = vmatprep.mubr.bf16.mxu0 0
        %935 = vmatmul.mubr.bf16.gmra.mrb[0].mxu0 %v859
        %v936 = vpop.f32.mrb[0].mxu0
        %v937 = vadd.f32 0.0, %v936
        %v938 = vpop.f32.mrb[0].mxu0
        %v939 = vpop.f32.mrb[0].mxu0
        %v940 = vadd.f32 0.0, %v939
        %v941 = vpop.f32.mrb[0].mxu0
        %942 = vmatprep.mubr.bf16.mxu0 0
        %943 = vmatmul.mubr.bf16.gmra.mrb[0].mxu0 %v860
        %v944 = vpop.f32.mrb[0].mxu0
        %v945 = vadd.f32 0.0, %v944
        %v946 = vpop.f32.mrb[0].mxu0
        %v947 = vpop.f32.mrb[0].mxu0
        %v948 = vadd.f32 0.0, %v947
        %v949 = vpop.f32.mrb[0].mxu0
        %950 = vmatprep.mubr.bf16.mxu0 0
        %951 = vmatmul.mubr.bf16.gmra.mrb[0].mxu0 %v861
        %v952 = vpop.f32.mrb[0].mxu0
        %v953 = vadd.f32 0.0, %v952
        %v954 = vpop.f32.mrb[0].mxu0
        %v955 = vpop.f32.mrb[0].mxu0
        %v956 = vadd.f32 0.0, %v955
        %v957 = vpop.f32.mrb[0].mxu0
        %958 = vdwg.mxu0
        %v959 = vrcp.pop %v823
        %v960 = vrcp.pop %v825
        %v961 = vrcp.pop %v827
        %v962 = vrcp.pop %v829
        %v963 = vrcp.pop %v831
        %v964 = vrcp.pop %v833
        %v965 = vrcp.pop %v835
        %v966 = vrcp.pop %v837
        %v967 = vrcp.pop %v839
        %v968 = vrcp.pop %v841
        %v969 = vrcp.pop %v843
        %v970 = vrcp.pop %v845
        %v971 = vrcp.pop %v847
        %v972 = vrcp.pop %v849
        %v973 = vrcp.pop %v851
        %v974 = vrcp.pop %v853
        %v975 = vmul.f32 %v897, %v959
        %v976 = vmul.f32 %v900, %v960
        %v977 = vmul.f32 %v905, %v961
        %v978 = vmul.f32 %v908, %v962
        %v979 = vmul.f32 %v913, %v963
        %v980 = vmul.f32 %v916, %v964
        %v981 = vmul.f32 %v921, %v965
        %v982 = vmul.f32 %v924, %v966
        %v983 = vmul.f32 %v929, %v967
        %v984 = vmul.f32 %v932, %v968
        %v985 = vmul.f32 %v937, %v969
        %v986 = vmul.f32 %v940, %v970
        %v987 = vmul.f32 %v945, %v971
        %v988 = vmul.f32 %v948, %v972
        %v989 = vmul.f32 %v953, %v973
        %v990 = vmul.f32 %v956, %v974
        %1007 = vrot.lane.b32.xlu0 %v975, 32
        %v1008 = vpop.permute.xlu0 %1007
        %1009 = vrot.lane.b32.xlu0 %v976, 32
        %v1010 = vpop.permute.xlu0 %1009
        %1011 = vrot.lane.b32.xlu0 %v977, 32
        %v1012 = vpop.permute.xlu0 %1011
        %1013 = vrot.lane.b32.xlu0 %v978, 32
        %v1014 = vpop.permute.xlu0 %1013
        %1015 = vrot.lane.b32.xlu0 %v979, 32
        %v1016 = vpop.permute.xlu0 %1015
        %1017 = vrot.lane.b32.xlu0 %v980, 32
        %v1018 = vpop.permute.xlu0 %1017
        %1019 = vrot.lane.b32.xlu0 %v981, 32
        %v1020 = vpop.permute.xlu0 %1019
        %1021 = vrot.lane.b32.xlu0 %v982, 32
        %v1022 = vpop.permute.xlu0 %1021
        %1023 = vrot.lane.b32.xlu0 %v983, 32
        %v1024 = vpop.permute.xlu0 %1023
        %1025 = vrot.lane.b32.xlu0 %v984, 32
        %v1026 = vpop.permute.xlu0 %1025
        %1027 = vrot.lane.b32.xlu0 %v985, 32
        %v1028 = vpop.permute.xlu0 %1027
        %1029 = vrot.lane.b32.xlu0 %v986, 32
        %v1030 = vpop.permute.xlu0 %1029
        %1031 = vrot.lane.b32.xlu0 %v987, 32
        %v1032 = vpop.permute.xlu0 %1031
        %1033 = vrot.lane.b32.xlu0 %v988, 32
        %v1034 = vpop.permute.xlu0 %1033
        %1035 = vrot.lane.b32.xlu0 %v989, 32
        %v1036 = vpop.permute.xlu0 %1035
        %1037 = vrot.lane.b32.xlu0 %v990, 32
        %v1038 = vpop.permute.xlu0 %1037
        %v1055 = vsel %vm298, %v251, %v1008
        %v1056 = vsel %vm298, %v252, %v1010
        %v1057 = vsel %vm298, %v253, %v1012
        %v1058 = vsel %vm298, %v254, %v1014
        %v1059 = vsel %vm298, %v255, %v1016
        %v1060 = vsel %vm298, %v256, %v1018
        %v1061 = vsel %vm298, %v257, %v1020
        %v1062 = vsel %vm298, %v258, %v1022
        %v1063 = vsel %vm298, %v259, %v1024
        %v1064 = vsel %vm298, %v260, %v1026
        %v1065 = vsel %vm298, %v261, %v1028
        %v1066 = vsel %vm298, %v262, %v1030
        %v1067 = vsel %vm298, %v263, %v1032
        %v1068 = vsel %vm298, %v264, %v1034
        %v1069 = vsel %vm298, %v265, %v1036
        %v1070 = vsel %vm298, %v266, %v1038
        %v1071 = vpack.c.bf16 %v1056, %v1055
        %v1072 = vpack.c.bf16 %v1058, %v1057
        %v1073 = vpack.c.bf16 %v1060, %v1059
        %v1074 = vpack.c.bf16 %v1062, %v1061
        %v1075 = vpack.c.bf16 %v1064, %v1063
        %v1076 = vpack.c.bf16 %v1066, %v1065
        %v1077 = vpack.c.bf16 %v1068, %v1067
        %v1078 = vpack.c.bf16 %v1070, %v1069
        %v1079 = vld [vmem:[%s4] sm:$0xf]
        %v1080 = vld [vmem:[%s4 + $0x4] sm:$0xf]
        %v1081 = vld [vmem:[%s4 + $0x8] sm:$0xf]
        %v1082 = vld [vmem:[%s4 + $0xc] sm:$0xf]
        %v1083 = vld [vmem:[%s4 + $0x10] sm:$0xf]
        %v1084 = vld [vmem:[%s4 + $0x14] sm:$0xf]
        %v1085 = vld [vmem:[%s4 + $0x18] sm:$0xf]
        %v1086 = vld [vmem:[%s4 + $0x1c] sm:$0xf]
        %v1087 = vld [vmem:[%s5] sm:$0x1]
        %v1089 = vlaneseq
        %v1090 = vshrl.u32 %v1089, 7
        %v1091 = vsub.s32 0, %v1090
        %v1092 = vrot.slane %v1087, %v1091
        %v1102 = vunpack.c.l.b16 %v1079
        %v1103 = vunpack.c.l.b16 %v1080
        %v1104 = vunpack.c.l.b16 %v1081
        %v1105 = vunpack.c.l.b16 %v1082
        %v1106 = vunpack.c.l.b16 %v1083
        %v1107 = vunpack.c.l.b16 %v1084
        %v1108 = vunpack.c.l.b16 %v1085
        %v1109 = vunpack.c.l.b16 %v1086
        %v1110 = vpack.c.b16 %v1103, %v1102
        %v1111 = vpack.c.b16 %v1105, %v1104
        %v1112 = vpack.c.b16 %v1107, %v1106
        %v1113 = vpack.c.b16 %v1109, %v1108
        %vm1118 = vcmask 523264
        %v1120 = vsel %vm1118, %v1071, 0
        %v1123 = vsel %vm1118, %v1072, 0
        %v1126 = vsel %vm1118, %v1073, 0
        %v1129 = vsel %vm1118, %v1074, 0
        %v1132 = vsel %vm1118, %v1075, 0
        %v1135 = vsel %vm1118, %v1076, 0
        %v1138 = vsel %vm1118, %v1077, 0
        %v1141 = vsel %vm1118, %v1078, 0
        %1143 = vmatprep.subr.bf16.mxu0 0
        %1144 = vmatpush1.bf16.msra.mxu0 %v1110
        %1145 = vmatprep.subr.bf16.mxu0 0
        %1146 = vmatpush1.bf16.msra.mxu0 %v1111
        %1147 = vmatprep.subr.bf16.mxu0 0
        %1148 = vmatpush1.bf16.msra.mxu0 %v1112
        %1149 = vmatprep.subr.bf16.mxu0 0
        %1150 = vmatpush1.bf16.msra.mxu0 %v1113
        %1151 = vmatprep.subr.bf16.mxu0 0
        %1152 = vmatpush1.bf16.msra.mxu0 0
        %1153 = vmatprep.subr.bf16.mxu0 0
        %1154 = vmatpush1.bf16.msra.mxu0 0
        %1155 = vmatprep.subr.bf16.mxu0 0
        %1156 = vmatpush1.bf16.msra.mxu0 0
        %1157 = vmatprep.subr.bf16.mxu0 0
        %1158 = vmatpush1.bf16.msra.mxu0 0
        %1159 = vmatprep.subr.bf16.mxu0 0
        %1160 = vmatpush1.bf16.msra.mxu0 0
        %1161 = vmatprep.subr.bf16.mxu0 0
        %1162 = vmatpush1.bf16.msra.mxu0 0
        %1163 = vmatprep.subr.bf16.mxu0 0
        %1164 = vmatpush1.bf16.msra.mxu0 0
        %1165 = vmatprep.subr.bf16.mxu0 0
        %1166 = vmatpush1.bf16.msra.mxu0 0
        %1167 = vmatprep.subr.bf16.mxu0 0
        %1168 = vmatpush1.bf16.msra.mxu0 0
        %1169 = vmatprep.subr.bf16.mxu0 0
        %1170 = vmatpush1.bf16.msra.mxu0 0
        %1171 = vmatprep.subr.bf16.mxu0 0
        %1172 = vmatpush1.bf16.msra.mxu0 0
        %1173 = vmatprep.subr.bf16.mxu0 0
        %1174 = vmatpush1.bf16.msra.mxu0 0
        %1175 = vmatprep.mubr.bf16.mxu0 0
        %1176 = vmatmul.mubr.bf16.gmra.mrb[0].mxu0 %v1120
        %v1177 = vpop.f32.mrb[0].mxu0
        %v1178 = vadd.f32 %v1092, %v1177
        %v1179 = vpop.f32.mrb[0].mxu0
        %v1180 = vpop.f32.mrb[0].mxu0
        %v1181 = vadd.f32 %v1092, %v1180
        %v1182 = vpop.f32.mrb[0].mxu0
        %1183 = vmatprep.mubr.bf16.mxu0 0
        %1184 = vmatmul.mubr.bf16.gmra.mrb[0].mxu0 %v1123
        %v1185 = vpop.f32.mrb[0].mxu0
        %v1186 = vadd.f32 %v1092, %v1185
        %v1187 = vpop.f32.mrb[0].mxu0
        %v1188 = vpop.f32.mrb[0].mxu0
        %v1189 = vadd.f32 %v1092, %v1188
        %v1190 = vpop.f32.mrb[0].mxu0
        %1191 = vmatprep.mubr.bf16.mxu0 0
        %1192 = vmatmul.mubr.bf16.gmra.mrb[0].mxu0 %v1126
        %v1193 = vpop.f32.mrb[0].mxu0
        %v1194 = vadd.f32 %v1092, %v1193
        %v1195 = vpop.f32.mrb[0].mxu0
        %v1196 = vpop.f32.mrb[0].mxu0
        %v1197 = vadd.f32 %v1092, %v1196
        %v1198 = vpop.f32.mrb[0].mxu0
        %1199 = vmatprep.mubr.bf16.mxu0 0
        %1200 = vmatmul.mubr.bf16.gmra.mrb[0].mxu0 %v1129
        %v1201 = vpop.f32.mrb[0].mxu0
        %v1202 = vadd.f32 %v1092, %v1201
        %v1203 = vpop.f32.mrb[0].mxu0
        %v1204 = vpop.f32.mrb[0].mxu0
        %v1205 = vadd.f32 %v1092, %v1204
        %v1206 = vpop.f32.mrb[0].mxu0
        %1207 = vmatprep.mubr.bf16.mxu0 0
        %1208 = vmatmul.mubr.bf16.gmra.mrb[0].mxu0 %v1132
        %v1209 = vpop.f32.mrb[0].mxu0
        %v1210 = vadd.f32 %v1092, %v1209
        %v1211 = vpop.f32.mrb[0].mxu0
        %v1212 = vpop.f32.mrb[0].mxu0
        %v1213 = vadd.f32 %v1092, %v1212
        %v1214 = vpop.f32.mrb[0].mxu0
        %1215 = vmatprep.mubr.bf16.mxu0 0
        %1216 = vmatmul.mubr.bf16.gmra.mrb[0].mxu0 %v1135
        %v1217 = vpop.f32.mrb[0].mxu0
        %v1218 = vadd.f32 %v1092, %v1217
        %v1219 = vpop.f32.mrb[0].mxu0
        %v1220 = vpop.f32.mrb[0].mxu0
        %v1221 = vadd.f32 %v1092, %v1220
        %v1222 = vpop.f32.mrb[0].mxu0
        %1223 = vmatprep.mubr.bf16.mxu0 0
        %1224 = vmatmul.mubr.bf16.gmra.mrb[0].mxu0 %v1138
        %v1225 = vpop.f32.mrb[0].mxu0
        %v1226 = vadd.f32 %v1092, %v1225
        %v1227 = vpop.f32.mrb[0].mxu0
        %v1228 = vpop.f32.mrb[0].mxu0
        %v1229 = vadd.f32 %v1092, %v1228
        %v1230 = vpop.f32.mrb[0].mxu0
        %1231 = vmatprep.mubr.bf16.mxu0 0
        %1232 = vmatmul.mubr.bf16.gmra.mrb[0].mxu0 %v1141
        %v1233 = vpop.f32.mrb[0].mxu0
        %v1234 = vadd.f32 %v1092, %v1233
        %v1235 = vpop.f32.mrb[0].mxu0
        %v1236 = vpop.f32.mrb[0].mxu0
        %v1237 = vadd.f32 %v1092, %v1236
        %v1238 = vpop.f32.mrb[0].mxu0
        %1239 = vdwg.mxu0
        %v1240 = vmul.f32 %v1178, %v1178
        %v1241 = vmul.f32 %v1181, %v1181
        %v1242 = vmul.f32 %v1186, %v1186
        %v1243 = vmul.f32 %v1189, %v1189
        %v1244 = vmul.f32 %v1194, %v1194
        %v1245 = vmul.f32 %v1197, %v1197
        %v1246 = vmul.f32 %v1202, %v1202
        %v1247 = vmul.f32 %v1205, %v1205
        %v1248 = vmul.f32 %v1210, %v1210
        %v1249 = vmul.f32 %v1213, %v1213
        %v1250 = vmul.f32 %v1218, %v1218
        %v1251 = vmul.f32 %v1221, %v1221
        %v1252 = vmul.f32 %v1226, %v1226
        %v1253 = vmul.f32 %v1229, %v1229
        %v1254 = vmul.f32 %v1234, %v1234
        %v1255 = vmul.f32 %v1237, %v1237
        %1256 = vadd.xlane.f32.xlu0 %v1240
        %v1257 = vpop.xlane.xlu0 %1256
        %1258 = vadd.xlane.f32.xlu0 %v1241
        %v1259 = vpop.xlane.xlu0 %1258
        %1260 = vadd.xlane.f32.xlu0 %v1242
        %v1261 = vpop.xlane.xlu0 %1260
        %1262 = vadd.xlane.f32.xlu0 %v1243
        %v1263 = vpop.xlane.xlu0 %1262
        %1264 = vadd.xlane.f32.xlu0 %v1244
        %v1265 = vpop.xlane.xlu0 %1264
        %1266 = vadd.xlane.f32.xlu0 %v1245
        %v1267 = vpop.xlane.xlu0 %1266
        %1268 = vadd.xlane.f32.xlu0 %v1246
        %v1269 = vpop.xlane.xlu0 %1268
        %1270 = vadd.xlane.f32.xlu0 %v1247
        %v1271 = vpop.xlane.xlu0 %1270
        %1272 = vadd.xlane.f32.xlu0 %v1248
        %v1273 = vpop.xlane.xlu0 %1272
        %1274 = vadd.xlane.f32.xlu0 %v1249
        %v1275 = vpop.xlane.xlu0 %1274
        %1276 = vadd.xlane.f32.xlu0 %v1250
        %v1277 = vpop.xlane.xlu0 %1276
        %1278 = vadd.xlane.f32.xlu0 %v1251
        %v1279 = vpop.xlane.xlu0 %1278
        %1280 = vadd.xlane.f32.xlu0 %v1252
        %v1281 = vpop.xlane.xlu0 %1280
        %1282 = vadd.xlane.f32.xlu0 %v1253
        %v1283 = vpop.xlane.xlu0 %1282
        %1284 = vadd.xlane.f32.xlu0 %v1254
        %v1285 = vpop.xlane.xlu0 %1284
        %1286 = vadd.xlane.f32.xlu0 %v1255
        %v1287 = vpop.xlane.xlu0 %1286
        %v1288 = vadd.f32 %v1257, 1e-12
        %v1289 = vadd.f32 %v1259, 1e-12
        %v1290 = vadd.f32 %v1261, 1e-12
        %v1291 = vadd.f32 %v1263, 1e-12
        %v1292 = vadd.f32 %v1265, 1e-12
        %v1293 = vadd.f32 %v1267, 1e-12
        %v1294 = vadd.f32 %v1269, 1e-12
        %v1295 = vadd.f32 %v1271, 1e-12
        %v1296 = vadd.f32 %v1273, 1e-12
        %v1297 = vadd.f32 %v1275, 1e-12
        %v1298 = vadd.f32 %v1277, 1e-12
        %v1299 = vadd.f32 %v1279, 1e-12
        %v1300 = vadd.f32 %v1281, 1e-12
        %v1301 = vadd.f32 %v1283, 1e-12
        %v1302 = vadd.f32 %v1285, 1e-12
        %v1303 = vadd.f32 %v1287, 1e-12
        %v1304 = vrsqrt.pop %v1288
        %v1305 = vrsqrt.pop %v1289
        %v1306 = vrsqrt.pop %v1290
        %v1307 = vrsqrt.pop %v1291
        %v1308 = vrsqrt.pop %v1292
        %v1309 = vrsqrt.pop %v1293
        %v1310 = vrsqrt.pop %v1294
        %v1311 = vrsqrt.pop %v1295
        %v1312 = vrsqrt.pop %v1296
        %v1313 = vrsqrt.pop %v1297
        %v1314 = vrsqrt.pop %v1298
        %v1315 = vrsqrt.pop %v1299
        %v1316 = vrsqrt.pop %v1300
        %v1317 = vrsqrt.pop %v1301
        %v1318 = vrsqrt.pop %v1302
        %v1319 = vrsqrt.pop %v1303
        %v1320 = vmul.f32 %v1178, %v1304
        %v1321 = vmul.f32 %v1181, %v1305
        %v1322 = vmul.f32 %v1186, %v1306
        %v1323 = vmul.f32 %v1189, %v1307
        %v1324 = vmul.f32 %v1194, %v1308
        %v1325 = vmul.f32 %v1197, %v1309
        %v1326 = vmul.f32 %v1202, %v1310
        %v1327 = vmul.f32 %v1205, %v1311
        %v1328 = vmul.f32 %v1210, %v1312
        %v1329 = vmul.f32 %v1213, %v1313
        %v1330 = vmul.f32 %v1218, %v1314
        %v1331 = vmul.f32 %v1221, %v1315
        %v1332 = vmul.f32 %v1226, %v1316
        %v1333 = vmul.f32 %v1229, %v1317
        %v1334 = vmul.f32 %v1234, %v1318
        %v1335 = vmul.f32 %v1237, %v1319
        %v1336 = vmax.f32 %v1320, 0.0
        %v1337 = vmax.f32 %v1321, 0.0
        %v1338 = vmax.f32 %v1322, 0.0
        %v1339 = vmax.f32 %v1323, 0.0
        %v1340 = vmax.f32 %v1324, 0.0
        %v1341 = vmax.f32 %v1325, 0.0
        %v1342 = vmax.f32 %v1326, 0.0
        %v1343 = vmax.f32 %v1327, 0.0
        %v1344 = vmax.f32 %v1328, 0.0
        %v1345 = vmax.f32 %v1329, 0.0
        %v1346 = vmax.f32 %v1330, 0.0
        %v1347 = vmax.f32 %v1331, 0.0
        %v1348 = vmax.f32 %v1332, 0.0
        %v1349 = vmax.f32 %v1333, 0.0
        %v1350 = vmax.f32 %v1334, 0.0
        %v1351 = vmax.f32 %v1335, 0.0
        %1352 = vst [vmem:[%s244] sm:$0xff] %v1336
        %1353 = vst [vmem:[%s244 + $0x8] sm:$0xff] %v1337
        %1354 = vst [vmem:[%s244 + $0x10] sm:$0xff] %v1338
        %1355 = vst [vmem:[%s244 + $0x18] sm:$0xff] %v1339
        %1356 = vst [vmem:[%s244 + $0x20] sm:$0xff] %v1340
        %1357 = vst [vmem:[%s244 + $0x28] sm:$0xff] %v1341
        %1358 = vst [vmem:[%s244 + $0x30] sm:$0xff] %v1342
        %1359 = vst [vmem:[%s244 + $0x38] sm:$0xff] %v1343
        %1360 = vst [vmem:[%s244 + $0x40] sm:$0xff] %v1344
        %1361 = vst [vmem:[%s244 + $0x48] sm:$0xff] %v1345
        %1362 = vst [vmem:[%s244 + $0x50] sm:$0xff] %v1346
        %1363 = vst [vmem:[%s244 + $0x58] sm:$0xff] %v1347
        %1364 = vst [vmem:[%s244 + $0x60] sm:$0xff] %v1348
        %1365 = vst [vmem:[%s244 + $0x68] sm:$0xff] %v1349
        %1366 = vst [vmem:[%s244 + $0x70] sm:$0xff] %v1350
        %1367 = vst [vmem:[%s244 + $0x78] sm:$0xff] %v1351
        %s1368 = sand.u32 %s159, 1
        %s1369 = scalar_lea.sflag [#allocation3], %s1368
        %s1370 = sand.u32 %s159, 1
        %s1371 = smul.addr %s1370, 128
        %s1372 = scalar_lea.vmem [#allocation2], %s1371
        // Predicated region
        $region45: #{tpu_custom_call.1} parent=43 // pred_check
          %p1373 = pneg %p169
        $region46: #{tpu_custom_call.1} parent=43 // pred_check_branch
          %1375 = sbr.rel (%p1373) target = $region48
        $region47: #{tpu_custom_call.1} parent=43 // pred_region
          %s1377 = ssub.s32 2048, 2048
          %1378 = vsyncadd %s1369, %s1377
          %s1379 = smul.addr %s20, 16
          %s1380 = smul.addr %s1379, 128
          %s1381 = scalar_lea.hbm %s6, %s1380
          %s1382 = sshll.u32 %s1372, 4
          %s1383 = int_to_ptr.vmem [resolvable:$true] %s1382
          %1388 = dma.vmem_to_hbm [thread:$0]  %s1383, 2048, %s1381, %s1369, 128, 128, 8
        $region48: #{tpu_custom_call.1} parent=43 // pred_fallthru
          _
      $region44: #{tpu_custom_call.1} parent=5 // pred_fallthru
        _
      %p1389 = scmp.le.s32.totalorder 2, %s15
      // Predicated region
      $region49: #{tpu_custom_call.1} parent=5 // pred_check
        %p1390 = pneg %p1389
      $region50: #{tpu_custom_call.1} parent=5 // pred_check_branch
        %1392 = sbr.rel (%p1390) target = $region52
      $region51: #{tpu_custom_call.1} parent=5 // pred_region
        %s1393 = ssub.s32 %s15, 2
        // Predicated region
        $region53: #{tpu_custom_call.1} parent=51 // pred_check
          %p1394 = pneg %p175
        $region54: #{tpu_custom_call.1} parent=51 // pred_check_branch
          %1396 = sbr.rel (%p1394) target = $region56
        $region55: #{tpu_custom_call.1} parent=51 // pred_region
          %s1397 = sand.u32 %s160, 1
          %s1398 = scalar_lea.sflag [#allocation3], %s1397
          %s1399 = sand.u32 %s160, 1
          %s1400 = smul.addr %s1399, 128
          %s1401 = scalar_lea.vmem [#allocation2], %s1400
          %1402 = dma.done %s1398, 2048
        $region56: #{tpu_custom_call.1} parent=51 // pred_fallthru
          _
      $region52: #{tpu_custom_call.1} parent=5 // pred_fallthru
        _
    $region6: #{tpu_custom_call.1} parent=1 // loop_footer
      %s19 = sadd.s32 1, %s15
    $region7: #{tpu_custom_call.1} parent=1 // loop_footer_branch
      %14 = sbr.rel target = $region3
    $region8: #{tpu_custom_call.1} parent=1 // loop_exit
      _
    %1403 = vsyncpa [#allocation3], 1
    %s1404 = scalar_lea.sflag [#allocation3], 1
    %1405 = vsyncpa %s1404, 1

</llo_original>
